<compile_context>
chip_gen: v7x
topology: tpu7x:2x2x1
jax: 0.10.0
libtpu: 0.0.40
codegen_flags: <defaults>
</compile_context>

<pallas_src>
import jax
import jax.numpy as jnp
from jax.experimental import pallas as pl
from jax.experimental.pallas import tpu as pltpu


_SQRT_2_OVER_PI = 0.7978845608028654          # sqrt(2/pi)
_GELU_C1 = _SQRT_2_OVER_PI
_GELU_C3 = _SQRT_2_OVER_PI * 0.044715          # folded constant for the cubic term


def _gelu_tanh(x):
    # 0.5*x*(1 + tanh(sqrt(2/pi)*(x + 0.044715*x^3))), constants folded,
    # x^3 computed as x*x2 to minimize VPU ops; tanh goes to the EUP slot.
    x2 = x * x
    u = x * (_GELU_C1 + _GELU_C3 * x2)
    return 0.5 * x * (1.0 + jnp.tanh(u))


def _ffn_kernel_out_acc(x_ref, w1_ref, b1_ref, w2_ref, b2_ref, o_ref):
    """f32 output: accumulate directly into the resident output block (no scratch)."""
    k = pl.program_id(1)

    @pl.when(k == 0)
    def _init():
        o_ref[...] = jnp.zeros_like(o_ref)

    h = jnp.dot(x_ref[...], w1_ref[0], preferred_element_type=jnp.float32)
    h = _gelu_tanh(h + b1_ref[...])
    o_ref[...] += jnp.dot(h.astype(w2_ref.dtype), w2_ref[...],
                          preferred_element_type=jnp.float32)

    @pl.when(k == pl.num_programs(1) - 1)
    def _finalize():
        o_ref[...] += b2_ref[...]          # bias added exactly once


def _ffn_kernel_scratch(x_ref, w1_ref, b1_ref, w2_ref, b2_ref, o_ref, acc_ref):
    """Non-f32 output: accumulate in an f32 VMEM scratch, cast on finalize."""
    k = pl.program_id(1)

    @pl.when(k == 0)
    def _init():
        acc_ref[...] = jnp.zeros_like(acc_ref)

    h = jnp.dot(x_ref[...], w1_ref[0], preferred_element_type=jnp.float32)
    h = _gelu_tanh(h + b1_ref[...])
    acc_ref[...] += jnp.dot(h.astype(w2_ref.dtype), w2_ref[...],
                            preferred_element_type=jnp.float32)

    @pl.when(k == pl.num_programs(1) - 1)
    def _finalize():
        o_ref[...] = (acc_ref[...] + b2_ref[...]).astype(o_ref.dtype)


def _round_up(x, m):
    return ((x + m - 1) // m) * m


def _vmem_budget_bytes():
    """Generation-aware VMEM budget (v7x: 64 MiB/TC; v5e/v6e: 128 MiB)."""
    try:
        cap = int(pltpu.get_tpu_info().vmem_capacity_bytes)
    except Exception:
        cap = 64 << 20                      # conservative fallback (v7x per-TC)
    return max(min(cap - (8 << 20), 100 << 20), 16 << 20)


_TM_CANDIDATES = (1024, 768, 512, 384, 256, 128)
_TH_CANDIDATES = (1024, 768, 512, 384, 256, 128)


def _choose_tiles(M, emb, hidden, emb_out, op_isz, out_isz, budget, use_scratch, w_bufs):
    """Pick (TM, TH). TM first (it sets the arithmetic intensity of the per-M-tile
    weight re-stream), then the largest TH whose buffered working set fits VMEM."""
    M_al = _round_up(M, 8)

    tm_all = [c for c in _TM_CANDIDATES if c <= M_al] or [M_al]
    # Prefer candidates with modest padding waste; for big M keep >=2 M-tiles so
    # the v7x megacore "parallel" axis has work for both TensorCores.
    need_two = M_al >= 2048
    good = [c for c in tm_all
            if _round_up(M, c) <= int(M * 1.3) + 8
            and (not need_two or _round_up(M, c) // c >= 2)]
    tm_cands = good or tm_all

    th_cands = [c for c in _TH_CANDIDATES if c <= hidden and hidden % c == 0] or [hidden]

    def footprint(tm, th):
        f = 2 * tm * emb * op_isz                 # x tile (double-buffered)
        f += w_bufs * emb * th * op_isz           # w1 chunk (streamed)
        f += w_bufs * th * emb_out * op_isz       # w2 chunk (streamed)
        f += 2 * th * 4 + 2 * emb_out * 4         # f32 bias chunks
        f += 2 * tm * emb_out * out_isz           # output tile
        if use_scratch:
            f += tm * emb_out * 4                 # f32 accumulator scratch
        return f

    for tm in tm_cands:                           # biggest TM first (roofline)
        for th in th_cands:                       # then biggest TH that fits
            if footprint(tm, th) <= budget:
                return tm, th
    return tm_cands[-1], th_cands[-1]             # smallest; compiler has final say


def feedforward_pallas(x, w1, b1, w2, b2, *, compute_dtype=jnp.bfloat16):
    """FeedForward: Linear(emb->4emb) -> GELU(tanh) -> Linear(4emb->emb).

    x : (batch, seq, emb)
    w1: (emb, hidden), b1: (hidden,)   with hidden = 4*emb  (w = nn.Linear.weight.T)
    w2: (hidden, emb), b2: (emb,)
    compute_dtype: MXU operand dtype (default bf16; accumulation, bias and GELU stay
                   f32). Pass jnp.float32 for bit-faithful f32 semantics.
    """
    batch, seq, emb = x.shape
    hidden = w1.shape[1]
    out_dtype = jnp.dtype(x.dtype)
    M = batch * seq

    compute_dtype = jnp.dtype(compute_dtype)
    if x.dtype != compute_dtype:
        x = x.astype(compute_dtype)
    w1 = w1.astype(compute_dtype)
    w2 = w2.astype(compute_dtype)
    b1 = b1.astype(jnp.float32)
    b2 = b2.astype(jnp.float32)
    # TODO(synk): optional fp8 (float8_e4m3fn) weight path for v7x decode shapes.

    x2d = x.reshape(M, emb)

    # Lane-dense output: pad out-features to a multiple of 128 (unmasked vst).
    emb_out = _round_up(emb, 128)
    if emb_out != emb:
        w2 = jnp.pad(w2, ((0, 0), (0, emb_out - emb)))
        b2 = jnp.pad(b2, (0, emb_out - emb))

    use_scratch = out_dtype != jnp.dtype(jnp.float32)
    op_isz = compute_dtype.itemsize
    out_isz = out_dtype.itemsize

    budget = _vmem_budget_bytes()
    w_bufs = 3 if M <= 128 else 2             # deeper weight prefetch for decode-size M
    TM, TH = _choose_tiles(M, emb, hidden, emb_out, op_isz, out_isz,
                           budget, use_scratch, w_bufs)

    # Pad tokens so the grid tiles M exactly (padded rows sliced off afterwards).
    M_pad = _round_up(M, TM)
    if M_pad != M:
        x2d = jnp.pad(x2d, ((0, M_pad - M), (0, 0)))

    grid_m = M_pad // TM
    grid_k = hidden // TH
    if grid_k == 1:
        w_bufs = 2                            # nothing to prefetch across k

    # Pre-block w1 so each streamed (emb, TH) chunk is a contiguous HBM slab instead
    # of `emb` strided reads (in production, do this once at weight-load time).
    w1b = w1.reshape(emb, grid_k, TH).transpose(1, 0, 2)      # (grid_k, emb, TH)

    b1_2d = b1.reshape(1, hidden)
    b2_2d = b2.reshape(1, emb_out)

    stream_kwargs = dict(pipeline_mode=pl.Buffered(w_bufs)) if w_bufs != 2 else {}
    in_specs = [
        pl.BlockSpec((TM, emb), lambda i, k: (i, 0)),                          # x (resident over k)
        pl.BlockSpec((1, emb, TH), lambda i, k: (k, 0, 0), **stream_kwargs),   # w1 chunk (streamed)
        pl.BlockSpec((1, TH), lambda i, k: (0, k)),                            # b1 chunk (streamed)
        pl.BlockSpec((TH, emb_out), lambda i, k: (k, 0), **stream_kwargs),     # w2 chunk (streamed)
        pl.BlockSpec((1, emb_out), lambda i, k: (0, 0)),                       # b2 (resident)
    ]
    out_spec = pl.BlockSpec((TM, emb_out), lambda i, k: (i, 0))

    if use_scratch:
        kernel = _ffn_kernel_scratch
        scratch_shapes = [pltpu.VMEM((TM, emb_out), jnp.float32)]
    else:
        kernel = _ffn_kernel_out_acc
        scratch_shapes = []

    # Honest HBM traffic estimate: weights/biases are re-streamed once per M-tile.
    w_bytes = (w1b.size * op_isz + w2.size * op_isz
               + b1_2d.size * 4 + b2_2d.size * 4)
    cost = pl.CostEstimate(
        flops=2 * M_pad * emb * hidden + 2 * M_pad * hidden * emb_out,
        transcendentals=M_pad * hidden,
        bytes_accessed=(x2d.size * op_isz + M_pad * emb_out * out_isz
                        + grid_m * w_bytes),
    )

    out2d = pl.pallas_call(
        kernel,
        out_shape=jax.ShapeDtypeStruct((M_pad, emb_out), out_dtype),
        grid=(grid_m, grid_k),
        in_specs=in_specs,
        out_specs=out_spec,
        scratch_shapes=scratch_shapes,
        compiler_params=pltpu.CompilerParams(
            dimension_semantics=("parallel", "arbitrary"),
            vmem_limit_bytes=int(budget)),
        cost_estimate=cost,
    )(x2d, w1b, b1_2d, w2, b2_2d)

    if M_pad != M:
        out2d = out2d[:M]
    if emb_out != emb:
        out2d = out2d[:, :emb]
    return out2d.reshape(batch, seq, emb)


def feedforward_ref(x, w1, b1, w2, b2):
    h = jnp.einsum("bse,eh->bsh", x, w1) + b1
    h = _gelu_tanh(h)
    return jnp.einsum("bsh,he->bse", h, w2) + b2


if __name__ == "__main__":
    # Small config consistent with the module: cfg['emb_dim'] = 32 -> hidden = 128.
    batch, seq, emb = 2, 8, 32
    hidden = 4 * emb

    key = jax.random.PRNGKey(0)
    kx, kw1, kb1, kw2, kb2 = jax.random.split(key, 5)
    x = jax.random.normal(kx, (batch, seq, emb), dtype=jnp.float32)
    # Deterministic synthetic parameters (shapes dictated by nn.Linear in __init__),
    # stored as (in_features, out_features) = transpose of torch's Linear.weight.
    w1 = jax.random.normal(kw1, (emb, hidden), dtype=jnp.float32) * 0.02
    b1 = jax.random.normal(kb1, (hidden,), dtype=jnp.float32) * 0.02
    w2 = jax.random.normal(kw2, (hidden, emb), dtype=jnp.float32) * 0.02
    b2 = jax.random.normal(kb2, (emb,), dtype=jnp.float32) * 0.02

    ref = feedforward_ref(x, w1, b1, w2, b2)

    # f32 operand path (matches PyTorch semantics, tight tolerance).
    out_f32 = feedforward_pallas(x, w1, b1, w2, b2, compute_dtype=jnp.float32)
    jax.block_until_ready(out_f32)
    assert out_f32.shape == (batch, seq, emb)
    assert jnp.allclose(out_f32, ref, atol=1e-5, rtol=1e-5), "f32 mismatch vs reference"

    # Default path: bf16 MXU operands with f32 accumulation (looser tolerance).
    out_bf16 = feedforward_pallas(x, w1, b1, w2, b2)
    jax.block_until_ready(out_bf16)
    assert out_bf16.shape == (batch, seq, emb)
    assert jnp.allclose(out_bf16, ref, atol=2e-2, rtol=2e-2), "bf16 mismatch vs reference"

    print("KERNEL_OK")
</pallas_src>

<mosaic_0001>
module attributes {stable_mosaic.version = 11 : i64} {
  func.func @_ffn_kernel_out_acc(%arg0: i32, %arg1: i32, %arg2: memref<16x32xf32, #tpu.memory_space<vmem>>, %arg3: memref<1x32x128xf32, #tpu.memory_space<vmem>>, %arg4: memref<1x128xf32, #tpu.memory_space<vmem>>, %arg5: memref<128x128xf32, #tpu.memory_space<vmem>>, %arg6: memref<1x128xf32, #tpu.memory_space<vmem>>, %arg7: memref<16x128xf32, #tpu.memory_space<vmem>>) attributes {dimension_semantics = [#tpu.dimension_semantics<parallel>, #tpu.dimension_semantics<arbitrary>], iteration_bounds = array<i64: 1, 1>, scalar_prefetch = 0 : i64, scratch_operands = 0 : i64, tpu.core_type = #tpu.core_type<tc>, window_params = [{transform_indices = @transform_0, window_bounds = array<i64: 16, 32>}, {transform_indices = @transform_1, window_bounds = array<i64: 1, 32, 128>}, {transform_indices = @transform_2, window_bounds = array<i64: 1, 128>}, {transform_indices = @transform_3, window_bounds = array<i64: 128, 128>}, {pipeline_mode = #tpu.pipeline_mode<synchronous>, transform_indices = @transform_4, window_bounds = array<i64: 1, 128>}, {transform_indices = @transform_5, window_bounds = array<i64: 16, 128>}]} {
    %c0_i32 = arith.constant 0 : i32
    %0 = arith.cmpi eq, %arg1, %c0_i32 : i32
    %1 = arith.extui %0 : i1 to i32
    %c0_i32_0 = arith.constant 0 : i32
    %2 = arith.cmpi ne, %1, %c0_i32_0 : i32
    scf.if %2 {
      %cst_20 = arith.constant 0.000000e+00 : f32
      %30 = vector.broadcast %cst_20 : f32 to vector<16x128xf32>
      %c0_21 = arith.constant 0 : index
      %c0_22 = arith.constant 0 : index
      %31 = vector.load %arg7[%c0_21, %c0_22] : memref<16x128xf32, #tpu.memory_space<vmem>>, vector<16x128xf32>
      tpu.vector_store %arg7[%c0_21, %c0_22], %30 {strides = array<i32>} : memref<16x128xf32, #tpu.memory_space<vmem>>, vector<16x128xf32>,
    } else {
    }
    %c0 = arith.constant 0 : index
    %c0_1 = arith.constant 0 : index
    %3 = vector.load %arg2[%c0, %c0_1] : memref<16x32xf32, #tpu.memory_space<vmem>>, vector<16x32xf32>
    %c0_2 = arith.constant 0 : index
    %c0_3 = arith.constant 0 : index
    %c0_4 = arith.constant 0 : index
    %4 = vector.load %arg3[%c0_2, %c0_3, %c0_4] : memref<1x32x128xf32, #tpu.memory_space<vmem>>, vector<1x32x128xf32>
    %5 = vector.shape_cast %4 : vector<1x32x128xf32> to vector<32x128xf32>
    %cst = arith.constant dense<0.000000e+00> : vector<16x128xf32>
    %6 = tpu.matmul %3, %5, %cst {dimension_numbers = #tpu.dot_dimension_numbers<[1], [0], [0], [1], [0, 0, 1, 1], [], []>} : vector<16x32xf32>, vector<32x128xf32>, vector<16x128xf32> -> vector<16x128xf32>
    %c0_5 = arith.constant 0 : index
    %c0_6 = arith.constant 0 : index
    %7 = vector.load %arg4[%c0_5, %c0_6] : memref<1x128xf32, #tpu.memory_space<vmem>>, vector<1x128xf32>
    %8 = vector.broadcast %7 : vector<1x128xf32> to vector<16x128xf32>
    %9 = arith.addf %6, %8 : vector<16x128xf32>
    %10 = arith.mulf %9, %9 : vector<16x128xf32>
    %cst_7 = arith.constant 0.0356774069 : f32
    %11 = vector.broadcast %cst_7 : f32 to vector<16x128xf32>
    %12 = arith.mulf %11, %10 : vector<16x128xf32>
    %cst_8 = arith.constant 0.797884583 : f32
    %13 = vector.broadcast %cst_8 : f32 to vector<16x128xf32>
    %14 = arith.addf %13, %12 : vector<16x128xf32>
    %15 = arith.mulf %9, %14 : vector<16x128xf32>
    %cst_9 = arith.constant 5.000000e-01 : f32
    %16 = vector.broadcast %cst_9 : f32 to vector<16x128xf32>
    %17 = arith.mulf %16, %9 : vector<16x128xf32>
    %18 = math.tanh %15 : vector<16x128xf32>
    %cst_10 = arith.constant 1.000000e+00 : f32
    %19 = vector.broadcast %cst_10 : f32 to vector<16x128xf32>
    %20 = arith.addf %19, %18 : vector<16x128xf32>
    %21 = arith.mulf %17, %20 : vector<16x128xf32>
    %c0_11 = arith.constant 0 : index
    %c0_12 = arith.constant 0 : index
    %22 = vector.load %arg7[%c0_11, %c0_12] : memref<16x128xf32, #tpu.memory_space<vmem>>, vector<16x128xf32>
    %c0_13 = arith.constant 0 : index
    %c0_14 = arith.constant 0 : index
    %23 = vector.load %arg5[%c0_13, %c0_14] : memref<128x128xf32, #tpu.memory_space<vmem>>, vector<128x128xf32>
    %cst_15 = arith.constant dense<0.000000e+00> : vector<16x128xf32>
    %24 = tpu.matmul %21, %23, %cst_15 {dimension_numbers = #tpu.dot_dimension_numbers<[1], [0], [0], [1], [0, 0, 1, 1], [], []>} : vector<16x128xf32>, vector<128x128xf32>, vector<16x128xf32> -> vector<16x128xf32>
    %25 = arith.addf %22, %24 : vector<16x128xf32>
    %c0_16 = arith.constant 0 : index
    %c0_17 = arith.constant 0 : index
    %26 = vector.load %arg7[%c0_16, %c0_17] : memref<16x128xf32, #tpu.memory_space<vmem>>, vector<16x128xf32>
    tpu.vector_store %arg7[%c0_16, %c0_17], %25 {strides = array<i32>} : memref<16x128xf32, #tpu.memory_space<vmem>>, vector<16x128xf32>,
    %c0_i32_18 = arith.constant 0 : i32
    %27 = arith.cmpi eq, %arg1, %c0_i32_18 : i32
    %28 = arith.extui %27 : i1 to i32
    %c0_i32_19 = arith.constant 0 : i32
    %29 = arith.cmpi ne, %28, %c0_i32_19 : i32
    scf.if %29 {
      %c0_20 = arith.constant 0 : index
      %c0_21 = arith.constant 0 : index
      %30 = vector.load %arg7[%c0_20, %c0_21] : memref<16x128xf32, #tpu.memory_space<vmem>>, vector<16x128xf32>
      %c0_22 = arith.constant 0 : index
      %c0_23 = arith.constant 0 : index
      %31 = vector.load %arg6[%c0_22, %c0_23] : memref<1x128xf32, #tpu.memory_space<vmem>>, vector<1x128xf32>
      %32 = vector.broadcast %31 : vector<1x128xf32> to vector<16x128xf32>
      %33 = arith.addf %30, %32 : vector<16x128xf32>
      %c0_24 = arith.constant 0 : index
      %c0_25 = arith.constant 0 : index
      %34 = vector.load %arg7[%c0_24, %c0_25] : memref<16x128xf32, #tpu.memory_space<vmem>>, vector<16x128xf32>
      tpu.vector_store %arg7[%c0_24, %c0_25], %33 {strides = array<i32>} : memref<16x128xf32, #tpu.memory_space<vmem>>, vector<16x128xf32>,
    } else {
    }
    return
  }
  func.func @transform_0(%arg0: i32, %arg1: i32) -> (i32, i32) {
    %c0_i32 = arith.constant 0 : i32
    %c0_i32_0 = arith.constant 0 : i32
    return %arg0, %c0_i32 : i32, i32
  }
  func.func @transform_1(%arg0: i32, %arg1: i32) -> (i32, i32, i32) {
    %c0_i32 = arith.constant 0 : i32
    %c0_i32_0 = arith.constant 0 : i32
    %c0_i32_1 = arith.constant 0 : i32
    return %arg1, %c0_i32, %c0_i32_0 : i32, i32, i32
  }
  func.func @transform_2(%arg0: i32, %arg1: i32) -> (i32, i32) {
    %c0_i32 = arith.constant 0 : i32
    %c0_i32_0 = arith.constant 0 : i32
    return %c0_i32, %arg1 : i32, i32
  }
  func.func @transform_3(%arg0: i32, %arg1: i32) -> (i32, i32) {
    %c0_i32 = arith.constant 0 : i32
    %c0_i32_0 = arith.constant 0 : i32
    return %arg1, %c0_i32 : i32, i32
  }
  func.func @transform_4(%arg0: i32, %arg1: i32) -> (i32, i32) {
    %c0_i32 = arith.constant 0 : i32
    %c0_i32_0 = arith.constant 0 : i32
    %c0_i32_1 = arith.constant 0 : i32
    return %c0_i32, %c0_i32_0 : i32, i32
  }
  func.func @transform_5(%arg0: i32, %arg1: i32) -> (i32, i32) {
    %c0_i32 = arith.constant 0 : i32
    %c0_i32_0 = arith.constant 0 : i32
    return %arg0, %c0_i32 : i32, i32
  }
}

</mosaic_0001>

<llo_original>
// kernel: tpu_custom_call.1
$region0: #{tpu_custom_call.1}
  #allocation0 [shape = 'u32[]', space=smem, size = 0x4, offset = 0x4, fixed_abs, tag = 'smem constant byte address 0x4 - core index']
  #allocation1 [shape = 'u32[144,128]{1,0:T(1,128)}', space=vmem, size = 0x12000, scoped, tag = 'internal scratch']
  %s0 = inlined_call_operand.hbm [shape: f32[16,32], index: 0, kind: input, shape index: {}]
  %s1 = inlined_call_operand.hbm [shape: f32[1,32,128], index: 1, kind: input, shape index: {}]
  %s2 = inlined_call_operand.vmem [shape: f32[1,128], index: 2, kind: input, shape index: {}]
  %s3 = inlined_call_operand.hbm [shape: f32[128,128], index: 3, kind: input, shape index: {}]
  %s4 = inlined_call_operand.vmem [shape: f32[1,128], index: 4, kind: input, shape index: {}]
  %s5 = inlined_call_operand.hbm [shape: f32[16,128], index: 5, kind: output, shape index: {}]
  %s6 = sld [smem:[#allocation0]]
  $region50: #{tpu_custom_call.1} parent=0
    _
  %s8 = ssub.s32 1, %s6
  %s9 = scalar_select 0, %s8, %s6
  $region1: #{tpu_custom_call.1} parent=0
    #allocation2 [shape = 'u8[8192]{0}', space=vmem, size = 0x2000, scoped, tag = 'input window, operand 0, single buffered']
    #allocation3 [shape = 's32[1]{0}', space=sflag, size = 0x4, scoped, tag = 'scoped memory for tpu_custom_call.1']
    #allocation4 [shape = 's32[1]{0}', space=sflag, size = 0x4, scoped, tag = 'scoped memory for tpu_custom_call.1']
    #allocation5 [shape = 'u8[16384]{0}', space=vmem, size = 0x4000, scoped, tag = 'input window, operand 1, single buffered']
    #allocation6 [shape = 's32[1]{0}', space=sflag, size = 0x4, scoped, tag = 'scoped memory for tpu_custom_call.1']
    #allocation7 [shape = 'u8[65536]{0}', space=vmem, size = 0x10000, scoped, tag = 'input window, operand 3, single buffered']
    #allocation8 [shape = 'u8[8192]{0}', space=vmem, size = 0x2000, scoped, tag = 'output window, operand 0, single buffered']
    %10 = vsyncpa [#allocation3], 0
    %11 = vsyncpa [#allocation6], 0
    %12 = vsyncpa [#allocation4], 0
    // Predicated region
    $region2: #{tpu_custom_call.1} parent=1 // pred_check
      _
    $region3: #{tpu_custom_call.1} parent=1 // pred_check_branch
      %14 = sbr.rel (0) target = $region5
    $region4: #{tpu_custom_call.1} parent=1 // pred_region
      %s16 = ssub.s32 256, 256
      %17 = vsyncadd [#allocation3], %s16
      %s18 = sshll.u32 [#allocation2], 4
      %s19 = int_to_ptr.vmem [resolvable:$true] %s18
      %24 = dma.hbm_to_vmem [thread:$0]  %s0, 256, %s19, [#allocation3], 128, 128, 8
    $region5: #{tpu_custom_call.1} parent=1 // pred_fallthru
      _
    // Predicated region
    $region6: #{tpu_custom_call.1} parent=1 // pred_check
      _
    $region7: #{tpu_custom_call.1} parent=1 // pred_check_branch
      %26 = sbr.rel (0) target = $region9
    $region8: #{tpu_custom_call.1} parent=1 // pred_region
      %s28 = ssub.s32 512, 512
      %29 = vsyncadd [#allocation6], %s28
      %s30 = sshll.u32 [#allocation5], 4
      %s31 = int_to_ptr.vmem [resolvable:$true] %s30
      %36 = dma.hbm_to_vmem [thread:$0]  %s1, 512, %s31, [#allocation6], 128, 128, 8
    $region9: #{tpu_custom_call.1} parent=1 // pred_fallthru
      _
    // Predicated region
    $region10: #{tpu_custom_call.1} parent=1 // pred_check
      _
    $region11: #{tpu_custom_call.1} parent=1 // pred_check_branch
      %38 = sbr.rel (0) target = $region13
    $region12: #{tpu_custom_call.1} parent=1 // pred_region
      _
    $region13: #{tpu_custom_call.1} parent=1 // pred_fallthru
      _
    // Predicated region
    $region14: #{tpu_custom_call.1} parent=1 // pred_check
      _
    $region15: #{tpu_custom_call.1} parent=1 // pred_check_branch
      %40 = sbr.rel (0) target = $region17
    $region16: #{tpu_custom_call.1} parent=1 // pred_region
      %s42 = ssub.s32 2048, 2048
      %43 = vsyncadd [#allocation6], %s42
      %s44 = sshll.u32 [#allocation7], 4
      %s45 = int_to_ptr.vmem [resolvable:$true] %s44
      %50 = dma.hbm_to_vmem [thread:$0]  %s3, 2048, %s45, [#allocation6], 128, 128, 8
    $region17: #{tpu_custom_call.1} parent=1 // pred_fallthru
      _
    // Predicated region
    $region18: #{tpu_custom_call.1} parent=1 // pred_check
      _
    $region19: #{tpu_custom_call.1} parent=1 // pred_check_branch
      %52 = sbr.rel (0) target = $region21
    $region20: #{tpu_custom_call.1} parent=1 // pred_region
      _
    $region21: #{tpu_custom_call.1} parent=1 // pred_fallthru
      _
    // Predicated region
    $region22: #{tpu_custom_call.1} parent=1 // pred_check
      _
    $region23: #{tpu_custom_call.1} parent=1 // pred_check_branch
      %54 = sbr.rel (0) target = $region25
    $region24: #{tpu_custom_call.1} parent=1 // pred_region
      %55 = dma.done [#allocation3], 256
    $region25: #{tpu_custom_call.1} parent=1 // pred_fallthru
      _
    // Predicated region
    $region26: #{tpu_custom_call.1} parent=1 // pred_check
      _
    $region27: #{tpu_custom_call.1} parent=1 // pred_check_branch
      %57 = sbr.rel (0) target = $region29
    $region28: #{tpu_custom_call.1} parent=1 // pred_region
      %58 = dma.done [#allocation6], 512
    $region29: #{tpu_custom_call.1} parent=1 // pred_fallthru
      _
    // Predicated region
    $region30: #{tpu_custom_call.1} parent=1 // pred_check
      _
    $region31: #{tpu_custom_call.1} parent=1 // pred_check_branch
      %60 = sbr.rel (0) target = $region33
    $region32: #{tpu_custom_call.1} parent=1 // pred_region
      %61 = dma.done [#allocation6], 2048
    $region33: #{tpu_custom_call.1} parent=1 // pred_fallthru
      _
    %p62 = scmp.eq.s32.totalorder 0, 0
    // Predicated region
    $region34: #{tpu_custom_call.1} parent=1 // pred_check
      %p63 = pneg %p62
    $region35: #{tpu_custom_call.1} parent=1 // pred_check_branch
      %65 = sbr.rel (%p63) target = $region37
    $region36: #{tpu_custom_call.1} parent=1 // pred_region
      %66 = vst [vmem:[#allocation8] sm:$0xff] 0.0
      %67 = vst [vmem:[#allocation8 + $0x8] sm:$0xff] 0.0
    $region37: #{tpu_custom_call.1} parent=1 // pred_fallthru
      _
    %v68 = vld [vmem:[#allocation2] sm:$0xff]
    %v69 = vld [vmem:[#allocation2 + $0x8] sm:$0xff]
    %v70 = vld [vmem:[#allocation5] sm:$0xff]
    %v71 = vld [vmem:[#allocation5 + $0x8] sm:$0xff]
    %v72 = vld [vmem:[#allocation5 + $0x10] sm:$0xff]
    %v73 = vld [vmem:[#allocation5 + $0x18] sm:$0xff]
    %v74 = vld [vmem:[%s2] sm:$0x1]
    %v76 = vlaneseq
    %v77 = vshrl.u32 %v76, 7
    %v78 = vsub.s32 0, %v77
    %v79 = vrot.slane %v74, %v78
    %vm81 = vcmask 261120
    %v83 = vsel %vm81, %v68, 0
    %v86 = vsel %vm81, %v69, 0
    %88 = vmatprep.subr.mxu0 0.0
    %89 = vmatpush1.msra.mxu0 %v70
    %90 = vmatprep.subr.mxu0 0.0
    %91 = vmatpush1.msra.mxu0 %v71
    %92 = vmatprep.subr.mxu0 0.0
    %93 = vmatpush1.msra.mxu0 %v72
    %94 = vmatprep.subr.mxu0 0.0
    %95 = vmatpush1.msra.mxu0 %v73
    %96 = vmatprep.subr.mxu0 0.0
    %97 = vmatpush1.msra.mxu0 0.0
    %98 = vmatprep.subr.mxu0 0.0
    %99 = vmatpush1.msra.mxu0 0.0
    %100 = vmatprep.subr.mxu0 0.0
    %101 = vmatpush1.msra.mxu0 0.0
    %102 = vmatprep.subr.mxu0 0.0
    %103 = vmatpush1.msra.mxu0 0.0
    %104 = vmatprep.subr.mxu0 0.0
    %105 = vmatpush1.msra.mxu0 0.0
    %106 = vmatprep.subr.mxu0 0.0
    %107 = vmatpush1.msra.mxu0 0.0
    %108 = vmatprep.subr.mxu0 0.0
    %109 = vmatpush1.msra.mxu0 0.0
    %110 = vmatprep.subr.mxu0 0.0
    %111 = vmatpush1.msra.mxu0 0.0
    %112 = vmatprep.subr.mxu0 0.0
    %113 = vmatpush1.msra.mxu0 0.0
    %114 = vmatprep.subr.mxu0 0.0
    %115 = vmatpush1.msra.mxu0 0.0
    %116 = vmatprep.subr.mxu0 0.0
    %117 = vmatpush1.msra.mxu0 0.0
    %118 = vmatprep.subr.mxu0 0.0
    %119 = vmatpush1.msra.mxu0 0.0
    %120 = vmatprep.subr.mxu0 0.0
    %121 = vmatpush1.msra.mxu0 0.0
    %122 = vmatprep.subr.mxu0 0.0
    %123 = vmatpush1.msra.mxu0 0.0
    %124 = vmatprep.subr.mxu0 0.0
    %125 = vmatpush1.msra.mxu0 0.0
    %126 = vmatprep.subr.mxu0 0.0
    %127 = vmatpush1.msra.mxu0 0.0
    %128 = vmatprep.subr.mxu0 0.0
    %129 = vmatpush1.msra.mxu0 0.0
    %130 = vmatprep.subr.mxu0 0.0
    %131 = vmatpush1.msra.mxu0 0.0
    %132 = vmatprep.subr.mxu0 0.0
    %133 = vmatpush1.msra.mxu0 0.0
    %134 = vmatprep.subr.mxu0 0.0
    %135 = vmatpush1.msra.mxu0 0.0
    %136 = vmatprep.subr.mxu0 0.0
    %137 = vmatpush1.msra.mxu0 0.0
    %138 = vmatprep.subr.mxu0 0.0
    %139 = vmatpush1.msra.mxu0 0.0
    %140 = vmatprep.subr.mxu0 0.0
    %141 = vmatpush1.msra.mxu0 0.0
    %142 = vmatprep.subr.mxu0 0.0
    %143 = vmatpush1.msra.mxu0 0.0
    %144 = vmatprep.subr.mxu0 0.0
    %145 = vmatpush1.msra.mxu0 0.0
    %146 = vmatprep.subr.mxu0 0.0
    %147 = vmatpush1.msra.mxu0 0.0
    %148 = vmatprep.subr.mxu0 0.0
    %149 = vmatpush1.msra.mxu0 0.0
    %150 = vmatprep.subr.mxu0 0.0
    %151 = vmatpush1.msra.mxu0 0.0
    %152 = vmatprep.mubr.f32.mxu0 0.0
    %153 = vmatmul.mubr.f32.gmra.mrb[0].mxu0 %v83
    %v154 = vpop.f32.mrb[0].mxu0
    %v155 = vadd.f32 %v79, %v154
    %v156 = vpop.f32.mrb[0].mxu0
    %157 = vmatprep.mubr.f32.mxu0 0.0
    %158 = vmatmul.mubr.f32.gmra.mrb[0].mxu0 %v86
    %v159 = vpop.f32.mrb[0].mxu0
    %v160 = vadd.f32 %v79, %v159
    %v161 = vpop.f32.mrb[0].mxu0
    %162 = vdwg.mxu0
    %v163 = vmul.f32 %v155, %v155
    %v164 = vmul.f32 %v160, %v160
    %v165 = vmul.f32 %v163, 0.035677407
    %v166 = vmul.f32 %v164, 0.035677407
    %v167 = vadd.f32 %v165, 0.7978846
    %v168 = vadd.f32 %v166, 0.7978846
    %v169 = vmul.f32 %v155, %v167
    %v170 = vmul.f32 %v160, %v168
    %v171 = vmul.f32 %v155, 0.5
    %v172 = vmul.f32 %v160, 0.5
    %v173 = vtanh.pop %v169
    %v174 = vtanh.pop %v170
    %v175 = vadd.f32 %v173, 1.0
    %v176 = vadd.f32 %v174, 1.0
    %v177 = vmul.f32 %v171, %v175
    %v178 = vmul.f32 %v172, %v176
    %v179 = vld [vmem:[#allocation8] sm:$0xff]
    %v180 = vld [vmem:[#allocation8 + $0x8] sm:$0xff]
    %v181 = vld [vmem:[#allocation7] sm:$0xff]
    %v182 = vld [vmem:[#allocation7 + $0x8] sm:$0xff]
    %v183 = vld [vmem:[#allocation7 + $0x10] sm:$0xff]
    %v184 = vld [vmem:[#allocation7 + $0x18] sm:$0xff]
    %v185 = vld [vmem:[#allocation7 + $0x20] sm:$0xff]
    %v186 = vld [vmem:[#allocation7 + $0x28] sm:$0xff]
    %v187 = vld [vmem:[#allocation7 + $0x30] sm:$0xff]
    %v188 = vld [vmem:[#allocation7 + $0x38] sm:$0xff]
    %v189 = vld [vmem:[#allocation7 + $0x40] sm:$0xff]
    %v190 = vld [vmem:[#allocation7 + $0x48] sm:$0xff]
    %v191 = vld [vmem:[#allocation7 + $0x50] sm:$0xff]
    %v192 = vld [vmem:[#allocation7 + $0x58] sm:$0xff]
    %v193 = vld [vmem:[#allocation7 + $0x60] sm:$0xff]
    %v194 = vld [vmem:[#allocation7 + $0x68] sm:$0xff]
    %v195 = vld [vmem:[#allocation7 + $0x70] sm:$0xff]
    %v196 = vld [vmem:[#allocation7 + $0x78] sm:$0xff]
    %197 = vmatprep.subr.mxu0 0.0
    %198 = vmatpush1.msra.mxu0 %v181
    %199 = vmatprep.subr.mxu0 0.0
    %200 = vmatpush1.msra.mxu0 %v182
    %201 = vmatprep.subr.mxu0 0.0
    %202 = vmatpush1.msra.mxu0 %v183
    %203 = vmatprep.subr.mxu0 0.0
    %204 = vmatpush1.msra.mxu0 %v184
    %205 = vmatprep.subr.mxu0 0.0
    %206 = vmatpush1.msra.mxu0 %v185
    %207 = vmatprep.subr.mxu0 0.0
    %208 = vmatpush1.msra.mxu0 %v186
    %209 = vmatprep.subr.mxu0 0.0
    %210 = vmatpush1.msra.mxu0 %v187
    %211 = vmatprep.subr.mxu0 0.0
    %212 = vmatpush1.msra.mxu0 %v188
    %213 = vmatprep.subr.mxu0 0.0
    %214 = vmatpush1.msra.mxu0 %v189
    %215 = vmatprep.subr.mxu0 0.0
    %216 = vmatpush1.msra.mxu0 %v190
    %217 = vmatprep.subr.mxu0 0.0
    %218 = vmatpush1.msra.mxu0 %v191
    %219 = vmatprep.subr.mxu0 0.0
    %220 = vmatpush1.msra.mxu0 %v192
    %221 = vmatprep.subr.mxu0 0.0
    %222 = vmatpush1.msra.mxu0 %v193
    %223 = vmatprep.subr.mxu0 0.0
    %224 = vmatpush1.msra.mxu0 %v194
    %225 = vmatprep.subr.mxu0 0.0
    %226 = vmatpush1.msra.mxu0 %v195
    %227 = vmatprep.subr.mxu0 0.0
    %228 = vmatpush1.msra.mxu0 %v196
    %229 = vmatprep.subr.mxu0 0.0
    %230 = vmatpush1.msra.mxu0 0.0
    %231 = vmatprep.subr.mxu0 0.0
    %232 = vmatpush1.msra.mxu0 0.0
    %233 = vmatprep.subr.mxu0 0.0
    %234 = vmatpush1.msra.mxu0 0.0
    %235 = vmatprep.subr.mxu0 0.0
    %236 = vmatpush1.msra.mxu0 0.0
    %237 = vmatprep.subr.mxu0 0.0
    %238 = vmatpush1.msra.mxu0 0.0
    %239 = vmatprep.subr.mxu0 0.0
    %240 = vmatpush1.msra.mxu0 0.0
    %241 = vmatprep.subr.mxu0 0.0
    %242 = vmatpush1.msra.mxu0 0.0
    %243 = vmatprep.subr.mxu0 0.0
    %244 = vmatpush1.msra.mxu0 0.0
    %245 = vmatprep.subr.mxu0 0.0
    %246 = vmatpush1.msra.mxu0 0.0
    %247 = vmatprep.subr.mxu0 0.0
    %248 = vmatpush1.msra.mxu0 0.0
    %249 = vmatprep.subr.mxu0 0.0
    %250 = vmatpush1.msra.mxu0 0.0
    %251 = vmatprep.subr.mxu0 0.0
    %252 = vmatpush1.msra.mxu0 0.0
    %253 = vmatprep.subr.mxu0 0.0
    %254 = vmatpush1.msra.mxu0 0.0
    %255 = vmatprep.subr.mxu0 0.0
    %256 = vmatpush1.msra.mxu0 0.0
    %257 = vmatprep.subr.mxu0 0.0
    %258 = vmatpush1.msra.mxu0 0.0
    %259 = vmatprep.subr.mxu0 0.0
    %260 = vmatpush1.msra.mxu0 0.0
    %261 = vmatprep.mubr.f32.mxu0 0.0
    %262 = vmatmul.mubr.f32.gmra.mrb[0].mxu0 %v177
    %v263 = vpop.f32.mrb[0].mxu0
    %v264 = vadd.f32 0.0, %v263
    %v265 = vpop.f32.mrb[0].mxu0
    %266 = vmatprep.mubr.f32.mxu0 0.0
    %267 = vmatmul.mubr.f32.gmra.mrb[0].mxu0 %v178
    %v268 = vpop.f32.mrb[0].mxu0
    %v269 = vadd.f32 0.0, %v268
    %v270 = vpop.f32.mrb[0].mxu0
    %271 = vdwg.mxu0
    %v272 = vadd.f32 %v179, %v264
    %v273 = vadd.f32 %v180, %v269
    %274 = vst [vmem:[#allocation8] sm:$0xff] %v272
    %275 = vst [vmem:[#allocation8 + $0x8] sm:$0xff] %v273
    // Predicated region
    $region38: #{tpu_custom_call.1} parent=1 // pred_check
      %p276 = pneg %p62
    $region39: #{tpu_custom_call.1} parent=1 // pred_check_branch
      %278 = sbr.rel (%p276) target = $region41
    $region40: #{tpu_custom_call.1} parent=1 // pred_region
      %v279 = vld [vmem:[#allocation8] sm:$0xff]
      %v280 = vld [vmem:[#allocation8 + $0x8] sm:$0xff]
      %v281 = vld [vmem:[%s4] sm:$0x1]
      %v283 = vlaneseq
      %v284 = vshrl.u32 %v283, 7
      %v285 = vsub.s32 0, %v284
      %v286 = vrot.slane %v281, %v285
      %v288 = vadd.f32 %v279, %v286
      %v289 = vadd.f32 %v280, %v286
      %290 = vst [vmem:[#allocation8] sm:$0xff] %v288
      %291 = vst [vmem:[#allocation8 + $0x8] sm:$0xff] %v289
    $region41: #{tpu_custom_call.1} parent=1 // pred_fallthru
      _
    // Predicated region
    $region42: #{tpu_custom_call.1} parent=1 // pred_check
      _
    $region43: #{tpu_custom_call.1} parent=1 // pred_check_branch
      %293 = sbr.rel (0) target = $region45
    $region44: #{tpu_custom_call.1} parent=1 // pred_region
      %s295 = ssub.s32 256, 256
      %296 = vsyncadd [#allocation4], %s295
      %s297 = sshll.u32 [#allocation8], 4
      %s298 = int_to_ptr.vmem [resolvable:$true] %s297
      %303 = dma.vmem_to_hbm [thread:$0]  %s298, 256, %s5, [#allocation4], 128, 128, 8
    $region45: #{tpu_custom_call.1} parent=1 // pred_fallthru
      _
    // Predicated region
    $region46: #{tpu_custom_call.1} parent=1 // pred_check
      _
    $region47: #{tpu_custom_call.1} parent=1 // pred_check_branch
      %305 = sbr.rel (0) target = $region49
    $region48: #{tpu_custom_call.1} parent=1 // pred_region
      %306 = dma.done [#allocation4], 256
    $region49: #{tpu_custom_call.1} parent=1 // pred_fallthru
      _
    %307 = vsyncpa [#allocation3], 1
    %308 = vsyncpa [#allocation6], 1
    %309 = vsyncpa [#allocation4], 1

</llo_original>
